<compile_context>
chip_gen: v6e
topology: v6e:2x2x1
jax: 0.10.0
libtpu: 0.0.40
codegen_flags: <defaults>
</compile_context>

<pallas_src>
import functools

import jax
import jax.numpy as jnp
from jax import lax
from jax.experimental import pallas as pl
from jax.experimental.pallas import tpu as pltpu


def _embedding_sim_kernel(x_ref, w_ref, b_ref, o_ref, m_ref, l_ref, mh_ref):
    # x_ref : (bm, H)   bf16  row tile (resident across the vocab grid axis)
    # w_ref : (bv, H)   bf16  vocab chunk of the table (native (V, H) layout)
    # b_ref : (1, bv)   f32   bias chunk (-1e30 in padded vocab columns)
    # o_ref : (bm, Vp)  f32   output tile (resident across the vocab grid axis)
    # m_ref : (bm, 1)   f32   running max
    # l_ref : (bm, 1)   f32   running sum of exp
    # mh_ref: (bm, nv)  f32   running-max snapshot per vocab chunk
    j = pl.program_id(1)
    nj = pl.num_programs(1)
    bv = w_ref.shape[0]
    nv = o_ref.shape[1] // bv  # static

    @pl.when(j == 0)
    def _init():
        m_ref[...] = jnp.full(m_ref.shape, -jnp.inf, dtype=m_ref.dtype)
        l_ref[...] = jnp.zeros(l_ref.shape, dtype=l_ref.dtype)

    # Logits for this vocab chunk: contract on H (last dim of both) -> (bm, bv), f32 acc.
    s = lax.dot_general(
        x_ref[...], w_ref[...],
        dimension_numbers=(((1,), (1,)), ((), ())),
        preferred_element_type=jnp.float32,
    ) + b_ref[...]

    m_prev = m_ref[...]
    m_new = jnp.maximum(m_prev, jnp.max(s, axis=-1, keepdims=True))
    p = jnp.exp(s - m_new)                                    # (bm, bv)
    alpha = jnp.exp(m_prev - m_new)                           # (bm, 1)
    l_ref[...] = alpha * l_ref[...] + jnp.sum(p, axis=-1, keepdims=True)
    m_ref[...] = m_new

    # Snapshot the running max used for this chunk into column j of the tiny history
    # scratch (select-RMW over (bm, nv): guaranteed to lower, negligible cost).
    col = lax.broadcasted_iota(jnp.int32, mh_ref.shape, 1)
    mh_ref[...] = jnp.where(col == j, m_new, mh_ref[...])

    # Aligned lane-dense store of just this chunk (offset j*bv is a multiple of bv,
    # itself a multiple of 128) -- no O(bm*V) read-modify-write per step.
    o_ref[:, pl.ds(pl.multiple_of(j * bv, bv), bv)] = p

    @pl.when(j == nj - 1)
    def _finalize():
        # One deferred pass: rescale every chunk to the final max and normalize.
        m_fin = m_ref[...]
        inv_l = pl.reciprocal(l_ref[...], approx=False)       # exact normalization
        for jj in range(nv):                                  # static unroll
            scale = jnp.exp(mh_ref[:, jj:jj + 1] - m_fin) * inv_l
            sl = slice(jj * bv, (jj + 1) * bv)
            o_ref[:, sl] = o_ref[:, sl] * scale


def _round_up(x, m):
    return (x + m - 1) // m * m


_VMEM_BUDGET_BYTES = 44 * 1024 * 1024  # conservative: fits under v7x's 64 MiB physical


def _vmem_bytes(bm, bv, v_pad, hidden, nv):
    out_b = 2 * bm * v_pad * 4                 # resident output tile (assume 2 bufs)
    w_b = 2 * bv * hidden * 2                  # double-buffered weight stream (bf16)
    x_b = 2 * bm * hidden * 2                  # x tile (bf16)
    bias_b = 2 * max(bv, 128) * 4
    scr_b = 2 * bm * 128 * 4 + bm * _round_up(nv, 128) * 4
    return out_b + w_b + x_b + bias_b + scr_b


def _pick_block_m(bm_want, bv, v_pad, hidden, nv):
    bm = bm_want
    while bm > 16 and _vmem_bytes(bm, bv, v_pad, hidden, nv) > _VMEM_BUDGET_BYTES:
        bm = max(16, _round_up(bm // 2, 16))
    return bm


@functools.partial(jax.jit, static_argnames=("block_m", "block_v"))
def embedding_sim(x, weight, bias=None, *, block_m=256, block_v=512):
    """softmax(x @ weight.T + bias, axis=-1).

    x: (..., H); weight: (V, H) -- ideally pre-cast to bf16 once by the caller;
    bias: (V,) or None.  Returns (..., V) float32.
    """
    *lead, hidden = x.shape
    vocab, h2 = weight.shape
    assert h2 == hidden, "weight hidden dim mismatch"
    m = 1
    for d in lead:
        m *= d

    # Vocab tiling: lane-dense chunks; pad the vocab so bv always divides it.
    bv = min(_round_up(block_v, 128), _round_up(vocab, 128))
    v_pad = _round_up(vocab, bv)
    nv = v_pad // bv

    # Weight stays in its native (V, H) layout; cast only if not already bf16 (the
    # caller pre-casts once so this is a no-op in the hot path).
    w = weight if weight.dtype == jnp.bfloat16 else weight.astype(jnp.bfloat16)
    if bias is None:
        bias = jnp.zeros((vocab,), jnp.float32)
    b = bias.astype(jnp.float32)
    if v_pad != vocab:
        w = jnp.pad(w, ((0, v_pad - vocab), (0, 0)))
        b = jnp.pad(b, (0, v_pad - vocab), constant_values=-1e30)  # mask padded cols
    b2 = b.reshape(1, v_pad)

    # Row tiling: multiple of 16 (bf16 sublane packing); shrink until VMEM fits.
    bm_want = min(_round_up(block_m, 16), _round_up(m, 16))
    bm = _pick_block_m(bm_want, bv, v_pad, hidden, nv)
    m_pad = _round_up(m, bm)

    x2 = x.reshape(m, hidden).astype(jnp.bfloat16)
    if m_pad != m:
        x2 = jnp.pad(x2, ((0, m_pad - m), (0, 0)))

    grid = (m_pad // bm, nv)
    vmem_limit = int(min(_vmem_bytes(bm, bv, v_pad, hidden, nv) + (4 << 20), 128 << 20))

    cost = pl.CostEstimate(
        flops=2 * m_pad * hidden * v_pad,
        transcendentals=m_pad * v_pad,
        bytes_accessed=(m_pad * hidden * 2                 # x (bf16)
                        + grid[0] * v_pad * hidden * 2     # weight streamed per M tile
                        + v_pad * 4                        # bias
                        + m_pad * v_pad * 4),              # softmax output (f32)
    )

    out2 = pl.pallas_call(
        _embedding_sim_kernel,
        out_shape=jax.ShapeDtypeStruct((m_pad, v_pad), jnp.float32),
        grid_spec=pltpu.PrefetchScalarGridSpec(
            num_scalar_prefetch=0,
            grid=grid,
            in_specs=[
                pl.BlockSpec((bm, hidden), lambda i, j: (i, 0)),  # x rows (resident over j)
                pl.BlockSpec((bv, hidden), lambda i, j: (j, 0)),  # weight vocab chunk
                pl.BlockSpec((1, bv), lambda i, j: (0, j)),       # bias chunk
            ],
            out_specs=pl.BlockSpec((bm, v_pad), lambda i, j: (i, 0)),
            scratch_shapes=[
                pltpu.VMEM((bm, 1), jnp.float32),    # running max
                pltpu.VMEM((bm, 1), jnp.float32),    # running sum
                pltpu.VMEM((bm, nv), jnp.float32),   # per-chunk max history
            ],
        ),
        compiler_params=pltpu.CompilerParams(
            dimension_semantics=("parallel", "arbitrary"),
            vmem_limit_bytes=vmem_limit,
        ),
        cost_estimate=cost,
    )(x2, w, b2)

    return out2[:m, :vocab].reshape(*lead, vocab)


if __name__ == "__main__":
    # Small shapes implied by the forward: x (batch, seq, hidden), weight (V, hidden).
    # V=250 deliberately non-divisible by the vocab tile to exercise the padding path.
    batch, seq, hidden, num_embeddings = 2, 8, 32, 250

    key = jax.random.PRNGKey(0)
    kx, kw = jax.random.split(key)
    x = jax.random.normal(kx, (batch, seq, hidden), dtype=jnp.float32)
    weight = jax.random.normal(kw, (num_embeddings, hidden), dtype=jnp.float32)
    bias = jnp.zeros((num_embeddings,), dtype=jnp.float32)   # module zero-inits bias

    # Cast the table to bf16 once, outside the per-call path (perf feedback).
    weight_bf16 = weight.astype(jnp.bfloat16)

    # block_v=128 forces 2 vocab tiles so online softmax + deferred rescale is exercised.
    out = embedding_sim(x, weight_bf16, bias, block_v=128)
    jax.block_until_ready(out)

    assert out.shape == (batch, seq, num_embeddings)

    # Exact normalization: softmax rows sum to 1 within f32 rounding.
    row_sums = jnp.sum(out, axis=-1)
    assert jnp.allclose(row_sums, 1.0, atol=1e-4), "softmax rows do not sum to 1"

    # Reference using the same bf16 matmul / f32 accumulation as the kernel.
    logits_bf16 = jnp.einsum(
        "bsh,vh->bsv",
        x.astype(jnp.bfloat16), weight_bf16,
        preferred_element_type=jnp.float32) + bias
    ref_bf16 = jax.nn.softmax(logits_bf16, axis=-1)
    assert jnp.allclose(out, ref_bf16, atol=2e-3), "mismatch vs bf16 reference"

    # Cross-check against exact f32 module semantics (loose: bf16 operand rounding).
    ref_f32 = jax.nn.softmax(jnp.einsum("bsh,vh->bsv", x, weight) + bias, axis=-1)
    assert jnp.allclose(out, ref_f32, atol=1e-1), "mismatch vs f32 reference"

    print("KERNEL_OK")
</pallas_src>

<mosaic_0001>
module attributes {stable_mosaic.version = 11 : i64} {
  func.func @_embedding_sim_kernel(%arg0: i32, %arg1: i32, %arg2: memref<16x32xbf16, #tpu.memory_space<vmem>>, %arg3: memref<128x32xbf16, #tpu.memory_space<vmem>>, %arg4: memref<1x128xf32, #tpu.memory_space<vmem>>, %arg5: memref<16x256xf32, #tpu.memory_space<vmem>>, %arg6: memref<16x1xf32, #tpu.memory_space<vmem>>, %arg7: memref<16x1xf32, #tpu.memory_space<vmem>>, %arg8: memref<16x2xf32, #tpu.memory_space<vmem>>) attributes {dimension_semantics = [#tpu.dimension_semantics<parallel>, #tpu.dimension_semantics<arbitrary>], iteration_bounds = array<i64: 1, 2>, scalar_prefetch = 0 : i64, scratch_operands = 3 : i64, tpu.core_type = #tpu.core_type<tc>, window_params = [{transform_indices = @transform_0, window_bounds = array<i64: 16, 32>}, {transform_indices = @transform_1, window_bounds = array<i64: 128, 32>}, {transform_indices = @transform_2, window_bounds = array<i64: 1, 128>}, {transform_indices = @transform_3, window_bounds = array<i64: 16, 256>}]} {
    %c0_i32 = arith.constant 0 : i32
    %0 = arith.cmpi eq, %arg1, %c0_i32 : i32
    %1 = arith.extui %0 : i1 to i32
    %c0_i32_0 = arith.constant 0 : i32
    %2 = arith.cmpi ne, %1, %c0_i32_0 : i32
    scf.if %2 {
      %cst_22 = arith.constant 0xFF800000 : f32
      %40 = vector.broadcast %cst_22 : f32 to vector<16x1xf32>
      %c0_23 = arith.constant 0 : index
      %c0_24 = arith.constant 0 : index
      %41 = vector.load %arg6[%c0_23, %c0_24] : memref<16x1xf32, #tpu.memory_space<vmem>>, vector<16x1xf32>
      tpu.vector_store %arg6[%c0_23, %c0_24], %40 {strides = array<i32>} : memref<16x1xf32, #tpu.memory_space<vmem>>, vector<16x1xf32>,
      %cst_25 = arith.constant 0.000000e+00 : f32
      %42 = vector.broadcast %cst_25 : f32 to vector<16x1xf32>
      %c0_26 = arith.constant 0 : index
      %c0_27 = arith.constant 0 : index
      %43 = vector.load %arg7[%c0_26, %c0_27] : memref<16x1xf32, #tpu.memory_space<vmem>>, vector<16x1xf32>
      tpu.vector_store %arg7[%c0_26, %c0_27], %42 {strides = array<i32>} : memref<16x1xf32, #tpu.memory_space<vmem>>, vector<16x1xf32>,
    } else {
    }
    %c0 = arith.constant 0 : index
    %c0_1 = arith.constant 0 : index
    %3 = vector.load %arg2[%c0, %c0_1] : memref<16x32xbf16, #tpu.memory_space<vmem>>, vector<16x32xbf16>
    %c0_2 = arith.constant 0 : index
    %c0_3 = arith.constant 0 : index
    %4 = vector.load %arg3[%c0_2, %c0_3] : memref<128x32xbf16, #tpu.memory_space<vmem>>, vector<128x32xbf16>
    %cst = arith.constant dense<0.000000e+00> : vector<16x128xf32>
    %5 = tpu.matmul %3, %4, %cst {dimension_numbers = #tpu.dot_dimension_numbers<[1], [1], [0], [0], [0, 0, 1, 0], [], []>} : vector<16x32xbf16>, vector<128x32xbf16>, vector<16x128xf32> -> vector<16x128xf32>
    %c0_4 = arith.constant 0 : index
    %c0_5 = arith.constant 0 : index
    %6 = vector.load %arg4[%c0_4, %c0_5] : memref<1x128xf32, #tpu.memory_space<vmem>>, vector<1x128xf32>
    %7 = vector.broadcast %6 : vector<1x128xf32> to vector<16x128xf32>
    %8 = arith.addf %5, %7 : vector<16x128xf32>
    %c0_6 = arith.constant 0 : index
    %c0_7 = arith.constant 0 : index
    %9 = vector.load %arg6[%c0_6, %c0_7] : memref<16x1xf32, #tpu.memory_space<vmem>>, vector<16x1xf32>
    %cst_8 = arith.constant dense<0xFF800000> : vector<16xf32>
    %10 = vector.multi_reduction <maximumf>, %8, %cst_8 [1] : vector<16x128xf32> to vector<16xf32>
    %11 = vector.shape_cast %10 : vector<16xf32> to vector<16x1xf32>
    %12 = arith.maximumf %9, %11 : vector<16x1xf32>
    %13 = vector.broadcast %12 : vector<16x1xf32> to vector<16x128xf32>
    %14 = arith.subf %8, %13 : vector<16x128xf32>
    %15 = math.exp %14 : vector<16x128xf32>
    %16 = arith.subf %9, %12 : vector<16x1xf32>
    %17 = math.exp %16 : vector<16x1xf32>
    %c0_9 = arith.constant 0 : index
    %c0_10 = arith.constant 0 : index
    %18 = vector.load %arg7[%c0_9, %c0_10] : memref<16x1xf32, #tpu.memory_space<vmem>>, vector<16x1xf32>
    %19 = arith.mulf %17, %18 : vector<16x1xf32>
    %cst_11 = arith.constant dense<0.000000e+00> : vector<16xf32>
    %20 = vector.multi_reduction <add>, %15, %cst_11 [1] : vector<16x128xf32> to vector<16xf32>
    %21 = vector.shape_cast %20 : vector<16xf32> to vector<16x1xf32>
    %22 = arith.addf %19, %21 : vector<16x1xf32>
    %c0_12 = arith.constant 0 : index
    %c0_13 = arith.constant 0 : index
    %23 = vector.load %arg7[%c0_12, %c0_13] : memref<16x1xf32, #tpu.memory_space<vmem>>, vector<16x1xf32>
    tpu.vector_store %arg7[%c0_12, %c0_13], %22 {strides = array<i32>} : memref<16x1xf32, #tpu.memory_space<vmem>>, vector<16x1xf32>,
    %c0_14 = arith.constant 0 : index
    %c0_15 = arith.constant 0 : index
    %24 = vector.load %arg6[%c0_14, %c0_15] : memref<16x1xf32, #tpu.memory_space<vmem>>, vector<16x1xf32>
    tpu.vector_store %arg6[%c0_14, %c0_15], %12 {strides = array<i32>} : memref<16x1xf32, #tpu.memory_space<vmem>>, vector<16x1xf32>,
    %25 = tpu.iota {dimensions = array<i32: 1>} : vector<16x2xi32>
    %26 = vector.broadcast %arg1 : i32 to vector<16x2xi32>
    %27 = arith.cmpi eq, %25, %26 : vector<16x2xi32>
    %c0_16 = arith.constant 0 : index
    %c0_17 = arith.constant 0 : index
    %28 = vector.load %arg8[%c0_16, %c0_17] : memref<16x2xf32, #tpu.memory_space<vmem>>, vector<16x2xf32>
    %29 = vector.shape_cast %12 : vector<16x1xf32> to vector<16x1xf32>
    %30 = vector.broadcast %29 : vector<16x1xf32> to vector<16x2xf32>
    %31 = arith.select %27, %30, %28 : vector<16x2xi1>, vector<16x2xf32>
    %c0_18 = arith.constant 0 : index
    %c0_19 = arith.constant 0 : index
    %32 = vector.load %arg8[%c0_18, %c0_19] : memref<16x2xf32, #tpu.memory_space<vmem>>, vector<16x2xf32>
    tpu.vector_store %arg8[%c0_18, %c0_19], %31 {strides = array<i32>} : memref<16x2xf32, #tpu.memory_space<vmem>>, vector<16x2xf32>,
    %c128_i32 = arith.constant 128 : i32
    %33 = arith.muli %arg1, %c128_i32 : i32
    %34 = tpu.assume_multiple %33, 128 : i32
    %c0_20 = arith.constant 0 : index
    %35 = arith.index_cast %34 : i32 to index
    %36 = vector.load %arg5[%c0_20, %35] : memref<16x256xf32, #tpu.memory_space<vmem>>, vector<16x128xf32>
    tpu.vector_store %arg5[%c0_20, %35], %15 {strides = array<i32>} : memref<16x256xf32, #tpu.memory_space<vmem>>, vector<16x128xf32>,
    %c1_i32 = arith.constant 1 : i32
    %37 = arith.cmpi eq, %arg1, %c1_i32 : i32
    %38 = arith.extui %37 : i1 to i32
    %c0_i32_21 = arith.constant 0 : i32
    %39 = arith.cmpi ne, %38, %c0_i32_21 : i32
    scf.if %39 {
      %c0_22 = arith.constant 0 : index
      %c0_23 = arith.constant 0 : index
      %40 = vector.load %arg6[%c0_22, %c0_23] : memref<16x1xf32, #tpu.memory_space<vmem>>, vector<16x1xf32>
      %c0_24 = arith.constant 0 : index
      %c0_25 = arith.constant 0 : index
      %41 = vector.load %arg7[%c0_24, %c0_25] : memref<16x1xf32, #tpu.memory_space<vmem>>, vector<16x1xf32>
      %42 = tpu.reciprocal %41 : vector<16x1xf32> -> vector<16x1xf32>
      %c0_26 = arith.constant 0 : index
      %c0_27 = arith.constant 0 : index
      %43 = vector.load %arg8[%c0_26, %c0_27] : memref<16x2xf32, #tpu.memory_space<vmem>>, vector<16x1xf32>
      %44 = arith.subf %43, %40 : vector<16x1xf32>
      %45 = math.exp %44 : vector<16x1xf32>
      %46 = arith.mulf %45, %42 : vector<16x1xf32>
      %c0_28 = arith.constant 0 : index
      %c0_29 = arith.constant 0 : index
      %47 = vector.load %arg5[%c0_28, %c0_29] : memref<16x256xf32, #tpu.memory_space<vmem>>, vector<16x128xf32>
      %48 = vector.broadcast %46 : vector<16x1xf32> to vector<16x128xf32>
      %49 = arith.mulf %47, %48 : vector<16x128xf32>
      %c0_30 = arith.constant 0 : index
      %c0_31 = arith.constant 0 : index
      %50 = vector.load %arg5[%c0_30, %c0_31] : memref<16x256xf32, #tpu.memory_space<vmem>>, vector<16x128xf32>
      tpu.vector_store %arg5[%c0_30, %c0_31], %49 {strides = array<i32>} : memref<16x256xf32, #tpu.memory_space<vmem>>, vector<16x128xf32>,
      %c0_32 = arith.constant 0 : index
      %c1 = arith.constant 1 : index
      %51 = vector.load %arg8[%c0_32, %c1] : memref<16x2xf32, #tpu.memory_space<vmem>>, vector<16x1xf32>
      %52 = arith.subf %51, %40 : vector<16x1xf32>
      %53 = math.exp %52 : vector<16x1xf32>
      %54 = arith.mulf %53, %42 : vector<16x1xf32>
      %c0_33 = arith.constant 0 : index
      %c128 = arith.constant 128 : index
      %55 = vector.load %arg5[%c0_33, %c128] : memref<16x256xf32, #tpu.memory_space<vmem>>, vector<16x128xf32>
      %56 = vector.broadcast %54 : vector<16x1xf32> to vector<16x128xf32>
      %57 = arith.mulf %55, %56 : vector<16x128xf32>
      %c0_34 = arith.constant 0 : index
      %c128_35 = arith.constant 128 : index
      %58 = vector.load %arg5[%c0_34, %c128_35] : memref<16x256xf32, #tpu.memory_space<vmem>>, vector<16x128xf32>
      tpu.vector_store %arg5[%c0_34, %c128_35], %57 {strides = array<i32>} : memref<16x256xf32, #tpu.memory_space<vmem>>, vector<16x128xf32>,
    } else {
    }
    return
  }
  func.func @transform_0(%arg0: i32, %arg1: i32) -> (i32, i32) {
    %c0_i32 = arith.constant 0 : i32
    %c0_i32_0 = arith.constant 0 : i32
    return %arg0, %c0_i32 : i32, i32
  }
  func.func @transform_1(%arg0: i32, %arg1: i32) -> (i32, i32) {
    %c0_i32 = arith.constant 0 : i32
    %c0_i32_0 = arith.constant 0 : i32
    return %arg1, %c0_i32 : i32, i32
  }
  func.func @transform_2(%arg0: i32, %arg1: i32) -> (i32, i32) {
    %c0_i32 = arith.constant 0 : i32
    %c0_i32_0 = arith.constant 0 : i32
    return %c0_i32, %arg1 : i32, i32
  }
  func.func @transform_3(%arg0: i32, %arg1: i32) -> (i32, i32) {
    %c0_i32 = arith.constant 0 : i32
    %c0_i32_0 = arith.constant 0 : i32
    return %arg0, %c0_i32 : i32, i32
  }
}

</mosaic_0001>

<llo_original>
// kernel: embedding_sim.1
$region0: #{embedding_sim.1}
  #allocation0 [shape = 'u32[]', space=smem, size = 0x4, offset = 0x4, fixed_abs, tag = 'smem constant byte address 0x4 - core index']
  #allocation1 [shape = 'u32[144,128]{1,0:T(1,128)}', space=vmem, size = 0x12000, scoped, tag = 'internal scratch']
  #allocation2 [shape = 'f32[16,1]{1,0:T(8,128)}', space=vmem, size = 0x2000, scoped, tag = 'scratch operand']
  #allocation3 [shape = 'f32[16,1]{1,0:T(8,128)}', space=vmem, size = 0x2000, scoped, tag = 'scratch operand']
  #allocation4 [shape = 'f32[16,2]{1,0:T(8,128)}', space=vmem, size = 0x2000, scoped, tag = 'scratch operand']
  %s0 = inlined_call_operand.vmem [shape: bf16[16,32], index: 0, kind: input, shape index: {}]
  %s1 = inlined_call_operand.vmem [shape: bf16[256,32], index: 1, kind: input, shape index: {}]
  %s2 = inlined_call_operand.vmem [shape: f32[1,256], index: 2, kind: input, shape index: {}]
  %s3 = inlined_call_operand.vmem [shape: f32[16,256], index: 3, kind: output, shape index: {}]
  %s4 = sld [smem:[#allocation0]]
  $region53: #{embedding_sim.1} parent=0
    _
  %s6 = ssub.s32 1, %s4
  %s7 = scalar_select 0, %s6, %s4
  loop: start=0, step=1, limit=4
  $region2: #{embedding_sim.1} parent=0 // loop_pre_header
    _
  $region3: #{embedding_sim.1} parent=0 // loop_header
    %s9 = sphi 0, %s13
    %p10 = scmp.ge.s32.totalorder %s9, 4
    %s16 = sphi 0, %s28
    %s17 = sphi 0, %s24
    %s18 = sphi 0, %s16
    %s19 = sphi 0, %s17
    %s20 = sphi 0, %s18
    %s21 = sphi 0, %s19
    %s31 = sphi 0, %s33
    %s34 = sphi 0, %s31
    %s35 = sphi 0, %s34
    %s51 = sphi 0, %s35
    %s57 = sphi 0, %s59
    %s60 = sphi 0, %s57
    %s61 = sphi 0, %s60
    %s77 = sphi 0, %s61
    %s83 = sphi 0, %s85
    %s86 = sphi 0, %s83
    %s87 = sphi 0, %s86
    %s103 = sphi 0, %s87
    %s109 = sphi 0, %s111
    %s112 = sphi 0, %s109
    %s113 = sphi 0, %s112
    %s129 = sphi 0, %s113
  $region4: #{embedding_sim.1} parent=0 // loop_header_branch
    %12 = sbr.rel (%p10) target = $region8
  $region5: #{embedding_sim.1} parent=0 // loop_body
    %s14 = ssub.s32 %s9, 1
    %s15 = ssub.s32 %s9, 2
    %s22 = sadd.s32 1, %s17
    %p23 = scmp.ge.s32.totalorder %s22, 2
    %s24 = scalar_select %p23, 0, %s22
    %s25 = sadd.s32 1, %s16
    %s26 = scalar_select %p23, %s25, %s16
    %p27 = scmp.ge.s32.totalorder %s26, 1
    %s28 = scalar_select %p27, 0, %s26
    %s29 = ssub.s32 %s16, %s28
    %p30 = scmp.eq.s32.totalorder %s29, 0
    %s32 = sadd.s32 %s31, 1
    %s33 = scalar_select %p30, %s31, %s32
    %p36 = pneg %p30
    %p37 = scmp.eq.s32.totalorder %s9, 1
    %p38 = por %p36, %p37
    %p39 = scmp.ne.s32.totalorder %s31, %s34
    %p40 = scmp.eq.s32.totalorder %s9, 0
    %p41 = por %p39, %p40
    %p42 = scmp.ne.s32.totalorder %s31, %s34
    %p43 = scmp.eq.s32.totalorder %s14, 1
    %p44 = por %p42, %p43
    %p45 = scmp.ne.s32.totalorder %s34, %s35
    %p46 = scmp.eq.s32.totalorder %s14, 0
    %p47 = por %p45, %p46
    %p48 = scmp.ne.s32.totalorder %s34, %s35
    %p49 = scmp.eq.s32.totalorder %s15, 1
    %p50 = por %p48, %p49
    %p52 = scmp.ne.s32.totalorder %s35, %s51
    %p53 = scmp.eq.s32.totalorder %s15, 0
    %p54 = por %p52, %p53
    %s55 = ssub.s32 %s17, %s24
    %p56 = scmp.eq.s32.totalorder %s55, 0
    %s58 = sadd.s32 %s57, 1
    %s59 = scalar_select %p56, %s57, %s58
    %p62 = pneg %p56
    %p63 = scmp.eq.s32.totalorder %s9, 1
    %p64 = por %p62, %p63
    %p65 = scmp.ne.s32.totalorder %s57, %s60
    %p66 = scmp.eq.s32.totalorder %s9, 0
    %p67 = por %p65, %p66
    %p68 = scmp.ne.s32.totalorder %s57, %s60
    %p69 = scmp.eq.s32.totalorder %s14, 1
    %p70 = por %p68, %p69
    %p71 = scmp.ne.s32.totalorder %s60, %s61
    %p72 = scmp.eq.s32.totalorder %s14, 0
    %p73 = por %p71, %p72
    %p74 = scmp.ne.s32.totalorder %s60, %s61
    %p75 = scmp.eq.s32.totalorder %s15, 1
    %p76 = por %p74, %p75
    %p78 = scmp.ne.s32.totalorder %s61, %s77
    %p79 = scmp.eq.s32.totalorder %s15, 0
    %p80 = por %p78, %p79
    %s81 = ssub.s32 %s17, %s24
    %p82 = scmp.eq.s32.totalorder %s81, 0
    %s84 = sadd.s32 %s83, 1
    %s85 = scalar_select %p82, %s83, %s84
    %p88 = pneg %p82
    %p89 = scmp.eq.s32.totalorder %s9, 1
    %p90 = por %p88, %p89
    %p91 = scmp.ne.s32.totalorder %s83, %s86
    %p92 = scmp.eq.s32.totalorder %s9, 0
    %p93 = por %p91, %p92
    %p94 = scmp.ne.s32.totalorder %s83, %s86
    %p95 = scmp.eq.s32.totalorder %s14, 1
    %p96 = por %p94, %p95
    %p97 = scmp.ne.s32.totalorder %s86, %s87
    %p98 = scmp.eq.s32.totalorder %s14, 0
    %p99 = por %p97, %p98
    %p100 = scmp.ne.s32.totalorder %s86, %s87
    %p101 = scmp.eq.s32.totalorder %s15, 1
    %p102 = por %p100, %p101
    %p104 = scmp.ne.s32.totalorder %s87, %s103
    %p105 = scmp.eq.s32.totalorder %s15, 0
    %p106 = por %p104, %p105
    %s107 = ssub.s32 %s16, %s28
    %p108 = scmp.eq.s32.totalorder %s107, 0
    %s110 = sadd.s32 %s109, 1
    %s111 = scalar_select %p108, %s109, %s110
    %p114 = pneg %p108
    %p115 = scmp.eq.s32.totalorder %s9, 1
    %p116 = por %p114, %p115
    %p117 = scmp.ne.s32.totalorder %s109, %s112
    %p118 = scmp.eq.s32.totalorder %s9, 0
    %p119 = por %p117, %p118
    %p120 = scmp.ne.s32.totalorder %s109, %s112
    %p121 = scmp.eq.s32.totalorder %s14, 1
    %p122 = por %p120, %p121
    %p123 = scmp.ne.s32.totalorder %s112, %s113
    %p124 = scmp.eq.s32.totalorder %s14, 0
    %p125 = por %p123, %p124
    %p126 = scmp.ne.s32.totalorder %s112, %s113
    %p127 = scmp.eq.s32.totalorder %s15, 1
    %p128 = por %p126, %p127
    %p130 = scmp.ne.s32.totalorder %s113, %s129
    %p131 = scmp.eq.s32.totalorder %s15, 0
    %p132 = por %p130, %p131
    %p133 = scmp.le.s32.totalorder 1, %s9
    %p134 = scmp.lt.s32.totalorder %s9, 3
    %p135 = pnand %p133, %p134
    %p136 = pneg %p135
    // Predicated region
    $region9: #{embedding_sim.1} parent=5 // pred_check
      _
    $region10: #{embedding_sim.1} parent=5 // pred_check_branch
      %138 = sbr.rel (%p135) target = $region12
    $region11: #{embedding_sim.1} parent=5 // pred_region
      %s139 = ssub.s32 %s9, 1
      // Predicated region
      $region13: #{embedding_sim.1} parent=11 // pred_check
        %p140 = pneg %p47
      $region14: #{embedding_sim.1} parent=11 // pred_check_branch
        %142 = sbr.rel (%p140) target = $region16
      $region15: #{embedding_sim.1} parent=11 // pred_region
        %s143 = smul.u32 2, %s18
        %p144 = scmp.lt.s32.totalorder %s143, 1
        %s145 = scalar_select %p144, %s143, 1
        %s146 = smul.addr %s145, 4
        %s147 = scalar_lea.vmem %s0, %s146
        %s148 = smul.u32 2, %s18
      $region16: #{embedding_sim.1} parent=11 // pred_fallthru
        _
    $region12: #{embedding_sim.1} parent=5 // pred_fallthru
      _
    %p149 = scmp.lt.s32.totalorder %s9, 2
    // Predicated region
    $region17: #{embedding_sim.1} parent=5 // pred_check
      %p150 = pneg %p149
    $region18: #{embedding_sim.1} parent=5 // pred_check_branch
      %152 = sbr.rel (%p150) target = $region20
    $region19: #{embedding_sim.1} parent=5 // pred_region
      // Predicated region
      $region21: #{embedding_sim.1} parent=19 // pred_check
        %p153 = pneg %p67
      $region22: #{embedding_sim.1} parent=19 // pred_check_branch
        %155 = sbr.rel (%p153) target = $region24
      $region23: #{embedding_sim.1} parent=19 // pred_region
        %s156 = smul.u32 16, %s17
        %p157 = scmp.lt.s32.totalorder %s156, 31
        %s158 = scalar_select %p157, %s156, 31
        %s159 = smul.addr %s158, 4
        %s160 = scalar_lea.vmem %s1, %s159
        %s161 = smul.u32 16, %s17
      $region24: #{embedding_sim.1} parent=19 // pred_fallthru
        _
      // Predicated region
      $region25: #{embedding_sim.1} parent=19 // pred_check
        %p162 = pneg %p93
      $region26: #{embedding_sim.1} parent=19 // pred_check_branch
        %164 = sbr.rel (%p162) target = $region28
      $region27: #{embedding_sim.1} parent=19 // pred_region
        %p165 = scmp.lt.s32.totalorder %s17, 1
        %s166 = scalar_select %p165, %s17, 1
        %s167 = scalar_lea.vmem %s2, %s166
      $region28: #{embedding_sim.1} parent=19 // pred_fallthru
        _
    $region20: #{embedding_sim.1} parent=5 // pred_fallthru
      _
    %p168 = scmp.le.s32.totalorder 1, %s9
    %p169 = scmp.lt.s32.totalorder %s9, 3
    %p170 = pnand %p168, %p169
    %p171 = pneg %p170
    // Predicated region
    $region29: #{embedding_sim.1} parent=5 // pred_check
      _
    $region30: #{embedding_sim.1} parent=5 // pred_check_branch
      %173 = sbr.rel (%p170) target = $region32
    $region31: #{embedding_sim.1} parent=5 // pred_region
      %s174 = ssub.s32 %s9, 1
      %s175 = smul.u32 2, %s18
      %p176 = scmp.lt.s32.totalorder %s175, 1
      %s177 = scalar_select %p176, %s175, 1
      %s178 = smul.addr %s177, 4
      %s179 = scalar_lea.vmem %s0, %s178
      %p180 = pneg %p47
      %p181 = pneg %p44
      %s182 = smul.u32 16, %s19
      %p183 = scmp.lt.s32.totalorder %s182, 31
      %s184 = scalar_select %p183, %s182, 31
      %s185 = smul.addr %s184, 4
      %s186 = scalar_lea.vmem %s1, %s185
      %p187 = pneg %p73
      %p188 = pneg %p70
      %p189 = scmp.lt.s32.totalorder %s19, 1
      %s190 = scalar_select %p189, %s19, 1
      %s191 = scalar_lea.vmem %s2, %s190
      %p192 = pneg %p99
      %p193 = pneg %p96
      %p194 = pneg %p125
      %p195 = pneg %p122
      %s196 = smul.u32 2, %s18
      %p197 = scmp.lt.s32.totalorder %s196, 1
      %s198 = scalar_select %p197, %s196, 1
      %s199 = smul.addr %s198, 2
      %s200 = smul.addr %s199, 8
      %s201 = scalar_lea.vmem %s3, %s200
      %s202 = smul.u32 2, %s18
      %p203 = scmp.lt.s32.totalorder %s202, 1
      %s204 = scalar_select %p203, %s202, 1
      %s205 = smul.addr %s204, 4
      %s206 = scalar_lea.vmem %s0, %s205
      %s207 = smul.u32 2, %s18
      %s208 = smul.u32 16, %s19
      %p209 = scmp.lt.s32.totalorder %s208, 31
      %s210 = scalar_select %p209, %s208, 31
      %s211 = smul.addr %s210, 4
      %s212 = scalar_lea.vmem %s1, %s211
      %s213 = smul.u32 16, %s19
      %p214 = scmp.lt.s32.totalorder %s19, 1
      %s215 = scalar_select %p214, %s19, 1
      %s216 = scalar_lea.vmem %s2, %s215
      %s217 = smul.u32 2, %s18
      %p218 = scmp.lt.s32.totalorder %s217, 1
      %s219 = scalar_select %p218, %s217, 1
      %s220 = smul.addr %s219, 2
      %s221 = smul.addr %s220, 8
      %s222 = scalar_lea.vmem %s3, %s221
      %s223 = smul.u32 2, %s18
      %p225 = scmp.eq.s32.totalorder %s19, 0
      // Predicated region
      $region33: #{embedding_sim.1} parent=31 // pred_check
        %p226 = pneg %p225
      $region34: #{embedding_sim.1} parent=31 // pred_check_branch
        %228 = sbr.rel (%p226) target = $region36
      $region35: #{embedding_sim.1} parent=31 // pred_region
        %vm229 = vcmask 7168
        %230 = vst.msk [vmem:[#allocation2] sm:$0xff] %vm229, -inf
        %231 = vst.msk [vmem:[#allocation2 + $0x8] sm:$0xff] %vm229, -inf
        %232 = vst.msk [vmem:[#allocation3] sm:$0xff] %vm229, 0.0
        %233 = vst.msk [vmem:[#allocation3 + $0x8] sm:$0xff] %vm229, 0.0
      $region36: #{embedding_sim.1} parent=31 // pred_fallthru
        _
      %v234 = vld [vmem:[%s206] sm:$0xf]
      %v235 = vld [vmem:[%s206 + $0x4] sm:$0xf]
      %v236 = vld [vmem:[%s212] sm:$0xf]
      %v237 = vld [vmem:[%s212 + $0x4] sm:$0xf]
      %v238 = vld [vmem:[%s212 + $0x8] sm:$0xf]
      %v239 = vld [vmem:[%s212 + $0xc] sm:$0xf]
      %v240 = vld [vmem:[%s212 + $0x10] sm:$0xf]
      %v241 = vld [vmem:[%s212 + $0x14] sm:$0xf]
      %v242 = vld [vmem:[%s212 + $0x18] sm:$0xf]
      %v243 = vld [vmem:[%s212 + $0x1c] sm:$0xf]
      %v244 = vld [vmem:[%s212 + $0x20] sm:$0xf]
      %v245 = vld [vmem:[%s212 + $0x24] sm:$0xf]
      %v246 = vld [vmem:[%s212 + $0x28] sm:$0xf]
      %v247 = vld [vmem:[%s212 + $0x2c] sm:$0xf]
      %v248 = vld [vmem:[%s212 + $0x30] sm:$0xf]
      %v249 = vld [vmem:[%s212 + $0x34] sm:$0xf]
      %v250 = vld [vmem:[%s212 + $0x38] sm:$0xf]
      %v251 = vld [vmem:[%s212 + $0x3c] sm:$0xf]
      %v252 = vld [vmem:[%s216] sm:$0x1]
      %v254 = vlaneseq
      %v255 = vshrl.u32 %v254, 7
      %v256 = vsub.s32 0, %v255
      %v257 = vrot.slane %v252, %v256
      %v261 = vunpack.c.l.b16 %v234
      %v262 = vunpack.c.l.b16 %v235
      %v263 = vpack.c.b16 %v262, %v261
      %v280 = vunpack.c.l.b16 %v236
      %v281 = vunpack.c.l.b16 %v237
      %v282 = vunpack.c.l.b16 %v238
      %v283 = vunpack.c.l.b16 %v239
      %v284 = vunpack.c.l.b16 %v240
      %v285 = vunpack.c.l.b16 %v241
      %v286 = vunpack.c.l.b16 %v242
      %v287 = vunpack.c.l.b16 %v243
      %v288 = vunpack.c.l.b16 %v244
      %v289 = vunpack.c.l.b16 %v245
      %v290 = vunpack.c.l.b16 %v246
      %v291 = vunpack.c.l.b16 %v247
      %v292 = vunpack.c.l.b16 %v248
      %v293 = vunpack.c.l.b16 %v249
      %v294 = vunpack.c.l.b16 %v250
      %v295 = vunpack.c.l.b16 %v251
      %v296 = vpack.c.b16 %v281, %v280
      %v297 = vpack.c.b16 %v283, %v282
      %v298 = vpack.c.b16 %v285, %v284
      %v299 = vpack.c.b16 %v287, %v286
      %v300 = vpack.c.b16 %v289, %v288
      %v301 = vpack.c.b16 %v291, %v290
      %v302 = vpack.c.b16 %v293, %v292
      %v303 = vpack.c.b16 %v295, %v294
      %vm304 = vcmask 261120
      %v306 = vsel %vm304, %v263, 0
      %v309 = vsel %vm304, %v296, 0
      %v312 = vsel %vm304, %v297, 0
      %v315 = vsel %vm304, %v298, 0
      %v318 = vsel %vm304, %v299, 0
      %v321 = vsel %vm304, %v300, 0
      %v324 = vsel %vm304, %v301, 0
      %v327 = vsel %vm304, %v302, 0
      %v330 = vsel %vm304, %v303, 0
      %332 = vmatprep.subr.bf16.mxu0 0
      %333 = vmatpush1.bf16.xpose.msra.mxu0 %v330
      %334 = vmatprep.subr.bf16.mxu0 0
      %335 = vmatpush1.bf16.xpose.msra.mxu0 %v327
      %336 = vmatprep.subr.bf16.mxu0 0
      %337 = vmatpush1.bf16.xpose.msra.mxu0 %v324
      %338 = vmatprep.subr.bf16.mxu0 0
      %339 = vmatpush1.bf16.xpose.msra.mxu0 %v321
      %340 = vmatprep.subr.bf16.mxu0 0
      %341 = vmatpush1.bf16.xpose.msra.mxu0 %v318
      %342 = vmatprep.subr.bf16.mxu0 0
      %343 = vmatpush1.bf16.xpose.msra.mxu0 %v315
      %344 = vmatprep.subr.bf16.mxu0 0
      %345 = vmatpush1.bf16.xpose.msra.mxu0 %v312
      %346 = vmatprep.subr.bf16.mxu0 0
      %347 = vmatpush1.bf16.xpose.msra.mxu0 %v309
      %348 = vmatprep.subr.bf16.mxu0 0
      %349 = vmatpush2.bf16.xpose.msra.mxu0 0
      %350 = vmatprep.subr.bf16.mxu0 0
      %351 = vmatpush2.bf16.xpose.msra.mxu0 0
      %352 = vmatprep.subr.bf16.mxu0 0
      %353 = vmatpush2.bf16.xpose.msra.mxu0 0
      %354 = vmatprep.subr.bf16.mxu0 0
      %355 = vmatpush2.bf16.xpose.msra.mxu0 0
      %356 = vmatprep.subr.bf16.mxu0 0
      %357 = vmatpush2.bf16.xpose.msra.mxu0 0
      %358 = vmatprep.subr.bf16.mxu0 0
      %359 = vmatpush2.bf16.xpose.msra.mxu0 0
      %360 = vmatprep.subr.bf16.mxu0 0
      %361 = vmatpush2.bf16.xpose.msra.mxu0 0
      %362 = vmatprep.subr.bf16.mxu0 0
      %363 = vmatpush2.bf16.xpose.msra.mxu0 0
      %364 = vmatprep.mubr.bf16.mxu0 0
      %365 = vmatmul.mubr.bf16.gmra.mxu0 %v306
      %v366 = vpop.f32.mrf.mxu0
      %v367 = vadd.f32 %v257, %v366
      %v368 = vpop.f32.mrf.mxu0
      %v369 = vpop.f32.mrf.mxu0
      %v370 = vadd.f32 %v257, %v369
      %v371 = vpop.f32.mrf.mxu0
      %372 = vdwg.mxu0
      %v373 = vld [vmem:[#allocation2] sm:$0xff]
      %v374 = vld [vmem:[#allocation2 + $0x8] sm:$0xff]
      %375 = vmax.xlane.f32.xlu0 %v367
      %v376 = vpop.xlane.xlu0 %375
      %377 = vmax.xlane.f32.xlu0 %v370
      %v378 = vpop.xlane.xlu0 %377
      %v379 = vmax.f32 %v373, %v376
      %v380 = vmax.f32 %v374, %v378
      %382 = vset.pattern.permute.xlu0 0
      %383 = vperm.xlu0 %382, %v379
      %v384 = vpop.permute.xlu0 %383
      %387 = vset.pattern.permute.xlu0 0
      %388 = vperm.xlu0 %387, %v380
      %v389 = vpop.permute.xlu0 %388
      %v391 = vsub.f32 %v367, %v384
      %v392 = vsub.f32 %v370, %v389
      %v393 = vmul.f32 %v391, 1.442695
      %v394 = vpow.pop %v393
      %v395 = vmul.f32 %v392, 1.442695
      %v396 = vpow.pop %v395
      %v397 = vsub.f32 %v373, %v379
      %v398 = vsub.f32 %v374, %v380
      %v399 = vmul.f32 %v397, 1.442695
      %v400 = vpow.pop %v399
      %v401 = vmul.f32 %v398, 1.442695
      %v402 = vpow.pop %v401
      %v403 = vld [vmem:[#allocation3] sm:$0xff]
      %v404 = vld [vmem:[#allocation3 + $0x8] sm:$0xff]
      %v405 = vmul.f32 %v400, %v403
      %v406 = vmul.f32 %v402, %v404
      %407 = vadd.xlane.f32.xlu0 %v394
      %v408 = vpop.xlane.xlu0 %407
      %409 = vadd.xlane.f32.xlu0 %v396
      %v410 = vpop.xlane.xlu0 %409
      %v411 = vadd.f32 %v405, %v408
      %v412 = vadd.f32 %v406, %v410
      %vm413 = vcmask 7168
      %414 = vst.msk [vmem:[#allocation3] sm:$0xff] %vm413, %v411
      %415 = vst.msk [vmem:[#allocation3 + $0x8] sm:$0xff] %vm413, %v412
      %416 = vst.msk [vmem:[#allocation2] sm:$0xff] %vm413, %v379
      %417 = vst.msk [vmem:[#allocation2 + $0x8] sm:$0xff] %vm413, %v380
      %v418 = vlaneseq
      %v419 = vand.u32 %v418, 127
      %v420 = vstv %s19
      %vm421 = vcmp.eq.s32.totalorder %v419, %v420
      %v422 = vld [vmem:[#allocation4] sm:$0xff]
      %v423 = vld [vmem:[#allocation4 + $0x8] sm:$0xff]
      %v424 = vsel %vm421, %v384, %v422
      %v425 = vsel %vm421, %v389, %v423
      %vm426 = vcmask 15360
      %427 = vst.msk [vmem:[#allocation4] sm:$0xff] %vm426, %v424
      %428 = vst.msk [vmem:[#allocation4 + $0x8] sm:$0xff] %vm426, %v425
      %s429 = smul.u32 %s19, 128
      %s430 = sshra.s32 %s429, 7
      %s431 = sand.u32 %s429, 127
      %s432 = smul.addr %s430, 8
      %s433 = scalar_lea.vmem %s222, %s432
      %434 = vst [vmem:[%s433] sm:$0xff] %v394
      %435 = vst [vmem:[%s433 + $0x10] sm:$0xff] %v396
      %p436 = scmp.eq.s32.totalorder %s19, 1
      // Predicated region
      $region37: #{embedding_sim.1} parent=31 // pred_check
        %p437 = pneg %p436
      $region38: #{embedding_sim.1} parent=31 // pred_check_branch
        %439 = sbr.rel (%p437) target = $region40
      $region39: #{embedding_sim.1} parent=31 // pred_region
        %v440 = vld [vmem:[#allocation2] sm:$0xff]
        %v441 = vld [vmem:[#allocation2 + $0x8] sm:$0xff]
        %v442 = vld [vmem:[#allocation3] sm:$0xff]
        %v443 = vld [vmem:[#allocation3 + $0x8] sm:$0xff]
        %v444 = vrcp.pop %v442
        %v445 = vrcp.pop %v443
        %v446 = vld [vmem:[#allocation4] sm:$0xff]
        %v447 = vld [vmem:[#allocation4 + $0x8] sm:$0xff]
        %v448 = vsub.f32 %v446, %v440
        %v449 = vsub.f32 %v447, %v441
        %v450 = vmul.f32 %v448, 1.442695
        %v451 = vpow.pop %v450
        %v452 = vmul.f32 %v449, 1.442695
        %v453 = vpow.pop %v452
        %v454 = vmul.f32 %v451, %v444
        %v455 = vmul.f32 %v453, %v445
        %v456 = vld [vmem:[%s222] sm:$0xff]
        %v457 = vld [vmem:[%s222 + $0x10] sm:$0xff]
        %459 = vset.pattern.permute.xlu0 0
        %460 = vperm.xlu0 %459, %v454
        %v461 = vpop.permute.xlu0 %460
        %464 = vset.pattern.permute.xlu0 0
        %465 = vperm.xlu0 %464, %v455
        %v466 = vpop.permute.xlu0 %465
        %v468 = vmul.f32 %v456, %v461
        %v469 = vmul.f32 %v457, %v466
        %470 = vst [vmem:[%s222] sm:$0xff] %v468
        %471 = vst [vmem:[%s222 + $0x10] sm:$0xff] %v469
        %v472 = vld [vmem:[#allocation4] sm:$0xff]
        %v473 = vld [vmem:[#allocation4 + $0x8] sm:$0xff]
        %476 = vrot.lane.b32.xlu0 %v440, 1
        %v477 = vpop.permute.xlu0 %476
        %478 = vrot.lane.b32.xlu0 %v441, 1
        %v479 = vpop.permute.xlu0 %478
        %v482 = vsub.f32 %v472, %v477
        %v483 = vsub.f32 %v473, %v479
        %v484 = vmul.f32 %v482, 1.442695
        %v485 = vpow.pop %v484
        %v486 = vmul.f32 %v483, 1.442695
        %v487 = vpow.pop %v486
        %490 = vrot.lane.b32.xlu0 %v444, 1
        %v491 = vpop.permute.xlu0 %490
        %492 = vrot.lane.b32.xlu0 %v445, 1
        %v493 = vpop.permute.xlu0 %492
        %v496 = vmul.f32 %v485, %v491
        %v497 = vmul.f32 %v487, %v493
        %v498 = vld [vmem:[%s222 + $0x8] sm:$0xff]
        %v499 = vld [vmem:[%s222 + $0x18] sm:$0xff]
        %501 = vset.pattern.permute.xlu0 1
        %502 = vperm.xlu0 %501, %v496
        %v503 = vpop.permute.xlu0 %502
        %506 = vset.pattern.permute.xlu0 1
        %507 = vperm.xlu0 %506, %v497
        %v508 = vpop.permute.xlu0 %507
        %v510 = vmul.f32 %v498, %v503
        %v511 = vmul.f32 %v499, %v508
        %512 = vst [vmem:[%s222 + $0x8] sm:$0xff] %v510
        %513 = vst [vmem:[%s222 + $0x18] sm:$0xff] %v511
      $region40: #{embedding_sim.1} parent=31 // pred_fallthru
        _
      %s514 = smul.u32 2, %s18
      %p515 = scmp.lt.s32.totalorder %s514, 1
      %s516 = scalar_select %p515, %s514, 1
      %s517 = smul.addr %s516, 2
      %s518 = smul.addr %s517, 8
      %s519 = scalar_lea.vmem %s3, %s518
      // Predicated region
      $region41: #{embedding_sim.1} parent=31 // pred_check
        %p520 = pneg %p122
      $region42: #{embedding_sim.1} parent=31 // pred_check_branch
        %522 = sbr.rel (%p520) target = $region44
      $region43: #{embedding_sim.1} parent=31 // pred_region
        %s523 = smul.u32 2, %s18
      $region44: #{embedding_sim.1} parent=31 // pred_fallthru
        _
      // Predicated region
      $region45: #{embedding_sim.1} parent=31 // pred_check
        %p524 = pneg %p122
      $region46: #{embedding_sim.1} parent=31 // pred_check_branch
        %526 = sbr.rel (%p524) target = $region48
      $region47: #{embedding_sim.1} parent=31 // pred_region
        %s527 = smul.u32 2, %s18
        %p528 = scmp.lt.s32.totalorder %s527, 1
        %s529 = scalar_select %p528, %s527, 1
        %s530 = smul.addr %s529, 2
        %s531 = smul.addr %s530, 8
        %s532 = scalar_lea.vmem %s3, %s531
      $region48: #{embedding_sim.1} parent=31 // pred_fallthru
        _
    $region32: #{embedding_sim.1} parent=5 // pred_fallthru
      _
    %p533 = scmp.le.s32.totalorder 2, %s9
    // Predicated region
    $region49: #{embedding_sim.1} parent=5 // pred_check
      %p534 = pneg %p533
    $region50: #{embedding_sim.1} parent=5 // pred_check_branch
      %536 = sbr.rel (%p534) target = $region52
    $region51: #{embedding_sim.1} parent=5 // pred_region
      %s537 = ssub.s32 %s9, 2
    $region52: #{embedding_sim.1} parent=5 // pred_fallthru
      _
  $region6: #{embedding_sim.1} parent=0 // loop_footer
    %s13 = sadd.s32 1, %s9
  $region7: #{embedding_sim.1} parent=0 // loop_footer_branch
    %8 = sbr.rel target = $region3
  $region8: #{embedding_sim.1} parent=0 // loop_exit
    _

</llo_original>
